<compile_context>
chip_gen: v7x
topology: tpu7x:2x2x1
jax: 0.10.0
libtpu: 0.0.40
codegen_flags: <defaults>
</compile_context>

<pallas_src>
import functools
import math

import jax
import jax.numpy as jnp
from jax.experimental import pallas as pl
from jax.experimental.pallas import tpu as pltpu

_HIGHEST = jax.lax.Precision.HIGHEST


def _round_up(n, m):
    return ((n + m - 1) // m) * m


# ---------------------------------------------------------------------------
# Fused kernel (batch on lanes)
# ---------------------------------------------------------------------------
def _afm_kernel(x_ref, wa_ref, ba_ref, wp_ref, bp_ref, wf_ref, bf_ref, o_ref,
                *, num_fields, embed_dim):
    F, E = num_fields, embed_dim
    x = x_ref[...]                                      # (F*E, TB) f32

    # Pairwise field products, stacked along sublanes -> (P*E, TB).
    # E is the sublane group size (8-aligned slices), so these are cheap.
    pairs = [(i, j) for i in range(F - 1) for j in range(i + 1, F)]
    inner = jnp.concatenate(
        [x[i * E:(i + 1) * E, :] * x[j * E:(j + 1) * E, :] for i, j in pairs],
        axis=0)

    # Attention MLP for ALL pairs in one MXU GEMM (block-diagonal weight,
    # M=P*A, K=P*E, N=TB), default precision (no HIGHEST multi-pass).
    z = jnp.dot(wa_ref[...], inner, preferred_element_type=jnp.float32)
    z = jnp.maximum(z + ba_ref[...], 0.0)               # (P*A, TB)

    # Per-pair projection to one score; rows padded to a full sublane group,
    # padded rows carry a -1e30 bias so the softmax ignores them.
    s = jnp.dot(wp_ref[...], z, preferred_element_type=jnp.float32)
    s = s + bp_ref[...]                                 # (Pp, TB)

    # Softmax over the pair (sublane) axis.
    m = jnp.max(s, axis=0, keepdims=True)
    e = jnp.exp(s - m)
    attn = e / jnp.sum(e, axis=0, keepdims=True)        # (Pp, TB)

    # TODO(synk): dropout(dropouts[0]) on attn and dropout(dropouts[1]) on the
    # pooled output are identity here (deterministic / eval-mode forward).

    # Attention-weighted pooling of the pair products (sublane-broadcast MACs,
    # pooled straight from the `inner` slab — no P separate live tensors).
    pooled = attn[0:1, :] * inner[0:E, :]
    for p in range(1, len(pairs)):
        pooled = pooled + attn[p:p + 1, :] * inner[p * E:(p + 1) * E, :]

    # Final fc (out_features=1): VPU multiply + sublane reduction; the store is
    # a lane-dense (1, TB) row (full-width vst).
    out = jnp.sum(pooled * wf_ref[...], axis=0, keepdims=True) + bf_ref[0]
    o_ref[...] = out.astype(o_ref.dtype)


# ---------------------------------------------------------------------------
# Parameter init (matches nn.Linear default init) and one-time prep
# ---------------------------------------------------------------------------
def init_afm_params(key, embed_dim, attn_size):
    ks = jax.random.split(key, 6)
    b_a = 1.0 / math.sqrt(embed_dim)
    b_p = 1.0 / math.sqrt(attn_size)
    b_f = 1.0 / math.sqrt(embed_dim)
    return dict(
        wa=jax.random.uniform(ks[0], (embed_dim, attn_size), jnp.float32, -b_a, b_a),
        ba=jax.random.uniform(ks[1], (attn_size,), jnp.float32, -b_a, b_a),
        wp=jax.random.uniform(ks[2], (attn_size, 1), jnp.float32, -b_p, b_p),
        bp=jax.random.uniform(ks[3], (1,), jnp.float32, -b_p, b_p),
        wf=jax.random.uniform(ks[4], (embed_dim, 1), jnp.float32, -b_f, b_f),
        bf=jax.random.uniform(ks[5], (1,), jnp.float32, -b_f, b_f),
    )


def prepare_afm_params(params, num_fields):
    """One-time prep: fold the per-pair Linears into block-diagonal weights in
    the batch-on-lanes orientation.  O(P^2) weight size — fine for the small
    field counts AFM is used with (a pair-tiled grid with online softmax would
    be the scalable variant for very large num_fields)."""
    wa = params["wa"]                                   # (E, A)
    E, A = wa.shape
    P = num_fields * (num_fields - 1) // 2
    Pp = _round_up(P, 8)                                # pairs padded to a sublane group
    eye = jnp.eye(P, dtype=jnp.float32)

    wa_bd = jnp.kron(eye, wa.T)                         # (P*A, P*E)
    ba_col = jnp.tile(params["ba"], P).reshape(P * A, 1)

    wp_bd = jnp.kron(eye, params["wp"].T)               # (P, P*A)
    wp_bd = jnp.concatenate(
        [wp_bd, jnp.zeros((Pp - P, P * A), jnp.float32)], axis=0)   # (Pp, P*A)
    bp_col = jnp.concatenate(
        [jnp.full((P, 1), params["bp"][0], jnp.float32),
         jnp.full((Pp - P, 1), -1e30, jnp.float32)], axis=0)        # (Pp, 1)

    return dict(
        wa_bd=wa_bd, ba_col=ba_col, wp_bd=wp_bd, bp_col=bp_col,
        wf_col=params["wf"].astype(jnp.float32),        # (E, 1)
        bf=params["bf"].astype(jnp.float32),            # (1,) -> SMEM
        num_fields=num_fields, embed_dim=E, attn_size=A,
        num_pairs=P, num_pairs_padded=Pp,
    )


# ---------------------------------------------------------------------------
# Forward wrapper (lane-tiled grid over the batch, weights resident)
# ---------------------------------------------------------------------------
def _pick_lane_tile(batch, max_tile=2048):
    """Lane (= batch) tile: a multiple of 128 in [128, max_tile], preferring
    >= 2 grid steps (v7x has 2 TensorCores).  At tb=2048 the per-step working
    set (~1.7 MiB: 2x double-buffered 256 KiB input tiles + ~1 MiB of
    intermediates + ~10 KiB weights) is far under every generation's
    scoped-VMEM default, so no vmem_limit_bytes override is required."""
    if batch <= 128:
        return batch                  # single block equal to the (small) batch
    half = (batch // 2) // 128 * 128
    return max(128, min(max_tile, half))


def afm_forward(prep, x, *, max_tile=2048):
    B, F, E = x.shape
    assert F == prep["num_fields"] and E == prep["embed_dim"]

    # Batch-on-lanes slab (F*E, B): one-time layout plumbing in XLA so that
    # everything inside the kernel is lane-dense.
    xt = x.reshape(B, F * E).T.astype(jnp.float32)

    tb = _pick_lane_tile(B, max_tile)
    grid = (pl.cdiv(B, tb),)          # ragged last block is fine: OOB lanes are
                                      # never written back and never mix with
                                      # valid lanes (reductions are sublane-wise)

    PA, PE = prep["wa_bd"].shape
    Pp = prep["wp_bd"].shape[0]

    kernel = functools.partial(_afm_kernel, num_fields=F, embed_dim=E)
    out = pl.pallas_call(
        kernel,
        out_shape=jax.ShapeDtypeStruct((1, B), jnp.float32),
        grid=grid,
        in_specs=[
            pl.BlockSpec((F * E, tb), lambda i: (0, i)),          # x slab tile
            pl.BlockSpec((PA, PE), lambda i: (0, 0)),             # block-diag attention W
            pl.BlockSpec((PA, 1), lambda i: (0, 0)),              # attention bias column
            pl.BlockSpec((Pp, PA), lambda i: (0, 0)),             # projection W (rows padded)
            pl.BlockSpec((Pp, 1), lambda i: (0, 0)),              # projection bias / -inf mask
            pl.BlockSpec((E, 1), lambda i: (0, 0)),               # fc weight column
            pl.BlockSpec(memory_space=pltpu.MemorySpace.SMEM),    # fc bias scalar
        ],
        out_specs=pl.BlockSpec((1, tb), lambda i: (0, i)),        # lane-dense row
        compiler_params=pltpu.CompilerParams(
            dimension_semantics=("parallel",)),
    )(xt, prep["wa_bd"], prep["ba_col"], prep["wp_bd"], prep["bp_col"],
      prep["wf_col"], prep["bf"])
    return out.reshape(B, 1)


# ---------------------------------------------------------------------------
# Pure-JAX reference (mirrors the PyTorch forward, eval mode, f32 HIGHEST)
# ---------------------------------------------------------------------------
def afm_reference(params, x):
    B, F, E = x.shape
    row = [i for i in range(F - 1) for _ in range(i + 1, F)]
    col = [j for i in range(F - 1) for j in range(i + 1, F)]
    inner = x[:, row, :] * x[:, col, :]                    # (B, P, E)
    z = jnp.maximum(
        jnp.einsum("bpe,ea->bpa", inner, params["wa"], precision=_HIGHEST)
        + params["ba"], 0.0)
    s = jnp.einsum("bpa,ao->bpo", z, params["wp"], precision=_HIGHEST)
    s = s + params["bp"]                                   # (B, P, 1)
    attn = jax.nn.softmax(s, axis=1)
    pooled = jnp.sum(attn * inner, axis=1)                 # (B, E)
    return jnp.dot(pooled, params["wf"], precision=_HIGHEST) + params["bf"]


if __name__ == "__main__":
    key = jax.random.PRNGKey(0)

    # Module config (small).
    embed_dim, attn_size = 8, 8
    num_fields = 4                       # -> 6 field pairs
    dropouts = (0.2, 0.2)                # identity in this deterministic forward
    batch = 300                          # exercises a multi-block ragged lane grid

    kp, kx = jax.random.split(key)
    params = init_afm_params(kp, embed_dim, attn_size)
    prep = prepare_afm_params(params, num_fields)

    x = jax.random.normal(kx, (batch, num_fields, embed_dim), jnp.float32)

    out = jax.block_until_ready(afm_forward(prep, x))
    ref = afm_reference(params, x)

    assert out.shape == (batch, 1), out.shape
    # Kernel dots run at default MXU precision (bf16 multiplies, f32 accumulate)
    # vs. the f32-HIGHEST reference -> expected deviation ~1e-3; 2e-2 is ample.
    err = float(jnp.max(jnp.abs(out - ref)))
    assert jnp.allclose(out, ref, atol=2e-2, rtol=2e-2), err

    print("KERNEL_OK")
</pallas_src>

<mosaic_0001>
module attributes {stable_mosaic.version = 11 : i64} {
  func.func @_afm_kernel(%arg0: i32, %arg1: memref<32x128xf32, #tpu.memory_space<vmem>>, %arg2: memref<48x48xf32, #tpu.memory_space<vmem>>, %arg3: memref<48x1xf32, #tpu.memory_space<vmem>>, %arg4: memref<8x48xf32, #tpu.memory_space<vmem>>, %arg5: memref<8x1xf32, #tpu.memory_space<vmem>>, %arg6: memref<8x1xf32, #tpu.memory_space<vmem>>, %arg7: memref<1xf32, #tpu.memory_space<smem>>, %arg8: memref<1x128xf32, #tpu.memory_space<vmem>>) attributes {dimension_semantics = [#tpu.dimension_semantics<parallel>], iteration_bounds = array<i64: 3>, scalar_prefetch = 0 : i64, scratch_operands = 0 : i64, tpu.core_type = #tpu.core_type<tc>, window_params = [{transform_indices = @transform_0, window_bounds = array<i64: 32, 128>}, {pipeline_mode = #tpu.pipeline_mode<synchronous>, transform_indices = @transform_1, window_bounds = array<i64: 48, 48>}, {pipeline_mode = #tpu.pipeline_mode<synchronous>, transform_indices = @transform_2, window_bounds = array<i64: 48, 1>}, {pipeline_mode = #tpu.pipeline_mode<synchronous>, transform_indices = @transform_3, window_bounds = array<i64: 8, 48>}, {pipeline_mode = #tpu.pipeline_mode<synchronous>, transform_indices = @transform_4, window_bounds = array<i64: 8, 1>}, {pipeline_mode = #tpu.pipeline_mode<synchronous>, transform_indices = @transform_5, window_bounds = array<i64: 8, 1>}, {transform_indices = @transform_6, window_bounds = array<i64: 1>}, {transform_indices = @transform_7, window_bounds = array<i64: 1, 128>}]} {
    %c0 = arith.constant 0 : index
    %c0_0 = arith.constant 0 : index
    %0 = vector.load %arg1[%c0, %c0_0] : memref<32x128xf32, #tpu.memory_space<vmem>>, vector<32x128xf32>
    %1 = vector.extract_strided_slice %0 {offsets = [0, 0], sizes = [8, 128], strides = [1, 1]} : vector<32x128xf32> to vector<8x128xf32>
    %2 = vector.extract_strided_slice %0 {offsets = [8, 0], sizes = [8, 128], strides = [1, 1]} : vector<32x128xf32> to vector<8x128xf32>
    %3 = arith.mulf %1, %2 : vector<8x128xf32>
    %4 = vector.extract_strided_slice %0 {offsets = [0, 0], sizes = [8, 128], strides = [1, 1]} : vector<32x128xf32> to vector<8x128xf32>
    %5 = vector.extract_strided_slice %0 {offsets = [16, 0], sizes = [8, 128], strides = [1, 1]} : vector<32x128xf32> to vector<8x128xf32>
    %6 = arith.mulf %4, %5 : vector<8x128xf32>
    %7 = vector.extract_strided_slice %0 {offsets = [0, 0], sizes = [8, 128], strides = [1, 1]} : vector<32x128xf32> to vector<8x128xf32>
    %8 = vector.extract_strided_slice %0 {offsets = [24, 0], sizes = [8, 128], strides = [1, 1]} : vector<32x128xf32> to vector<8x128xf32>
    %9 = arith.mulf %7, %8 : vector<8x128xf32>
    %10 = vector.extract_strided_slice %0 {offsets = [8, 0], sizes = [8, 128], strides = [1, 1]} : vector<32x128xf32> to vector<8x128xf32>
    %11 = vector.extract_strided_slice %0 {offsets = [16, 0], sizes = [8, 128], strides = [1, 1]} : vector<32x128xf32> to vector<8x128xf32>
    %12 = arith.mulf %10, %11 : vector<8x128xf32>
    %13 = vector.extract_strided_slice %0 {offsets = [8, 0], sizes = [8, 128], strides = [1, 1]} : vector<32x128xf32> to vector<8x128xf32>
    %14 = vector.extract_strided_slice %0 {offsets = [24, 0], sizes = [8, 128], strides = [1, 1]} : vector<32x128xf32> to vector<8x128xf32>
    %15 = arith.mulf %13, %14 : vector<8x128xf32>
    %16 = vector.extract_strided_slice %0 {offsets = [16, 0], sizes = [8, 128], strides = [1, 1]} : vector<32x128xf32> to vector<8x128xf32>
    %17 = vector.extract_strided_slice %0 {offsets = [24, 0], sizes = [8, 128], strides = [1, 1]} : vector<32x128xf32> to vector<8x128xf32>
    %18 = arith.mulf %16, %17 : vector<8x128xf32>
    %19 = tpu.concatenate %3, %6, %9, %12, %15, %18 in 0 : vector<8x128xf32>, vector<8x128xf32>, vector<8x128xf32>, vector<8x128xf32>, vector<8x128xf32>, vector<8x128xf32> -> vector<48x128xf32>
    %c0_1 = arith.constant 0 : index
    %c0_2 = arith.constant 0 : index
    %20 = vector.load %arg2[%c0_1, %c0_2] : memref<48x48xf32, #tpu.memory_space<vmem>>, vector<48x48xf32>
    %cst = arith.constant dense<0.000000e+00> : vector<48x128xf32>
    %21 = tpu.matmul %20, %19, %cst {dimension_numbers = #tpu.dot_dimension_numbers<[1], [0], [0], [1], [0, 0, 1, 1], [], []>} : vector<48x48xf32>, vector<48x128xf32>, vector<48x128xf32> -> vector<48x128xf32>
    %c0_3 = arith.constant 0 : index
    %c0_4 = arith.constant 0 : index
    %22 = vector.load %arg3[%c0_3, %c0_4] : memref<48x1xf32, #tpu.memory_space<vmem>>, vector<48x1xf32>
    %23 = vector.broadcast %22 : vector<48x1xf32> to vector<48x128xf32>
    %24 = arith.addf %21, %23 : vector<48x128xf32>
    %cst_5 = arith.constant 0.000000e+00 : f32
    %25 = vector.broadcast %cst_5 : f32 to vector<48x128xf32>
    %26 = arith.maximumf %24, %25 : vector<48x128xf32>
    %c0_6 = arith.constant 0 : index
    %c0_7 = arith.constant 0 : index
    %27 = vector.load %arg4[%c0_6, %c0_7] : memref<8x48xf32, #tpu.memory_space<vmem>>, vector<8x48xf32>
    %cst_8 = arith.constant dense<0.000000e+00> : vector<8x128xf32>
    %28 = tpu.matmul %27, %26, %cst_8 {dimension_numbers = #tpu.dot_dimension_numbers<[1], [0], [0], [1], [0, 0, 1, 1], [], []>} : vector<8x48xf32>, vector<48x128xf32>, vector<8x128xf32> -> vector<8x128xf32>
    %c0_9 = arith.constant 0 : index
    %c0_10 = arith.constant 0 : index
    %29 = vector.load %arg5[%c0_9, %c0_10] : memref<8x1xf32, #tpu.memory_space<vmem>>, vector<8x1xf32>
    %30 = vector.broadcast %29 : vector<8x1xf32> to vector<8x128xf32>
    %31 = arith.addf %28, %30 : vector<8x128xf32>
    %cst_11 = arith.constant dense<0xFF800000> : vector<128xf32>
    %32 = vector.multi_reduction <maximumf>, %31, %cst_11 [0] : vector<8x128xf32> to vector<128xf32>
    %33 = vector.shape_cast %32 : vector<128xf32> to vector<1x128xf32>
    %34 = vector.broadcast %33 : vector<1x128xf32> to vector<8x128xf32>
    %35 = arith.subf %31, %34 : vector<8x128xf32>
    %36 = math.exp %35 : vector<8x128xf32>
    %cst_12 = arith.constant dense<0.000000e+00> : vector<128xf32>
    %37 = vector.multi_reduction <add>, %36, %cst_12 [0] : vector<8x128xf32> to vector<128xf32>
    %38 = vector.shape_cast %37 : vector<128xf32> to vector<1x128xf32>
    %39 = vector.broadcast %38 : vector<1x128xf32> to vector<8x128xf32>
    %40 = arith.divf %36, %39 : vector<8x128xf32>
    %41 = vector.extract_strided_slice %40 {offsets = [0, 0], sizes = [1, 128], strides = [1, 1]} : vector<8x128xf32> to vector<1x128xf32>
    %42 = vector.extract_strided_slice %19 {offsets = [0, 0], sizes = [8, 128], strides = [1, 1]} : vector<48x128xf32> to vector<8x128xf32>
    %43 = vector.broadcast %41 : vector<1x128xf32> to vector<8x128xf32>
    %44 = arith.mulf %43, %42 : vector<8x128xf32>
    %45 = vector.extract_strided_slice %40 {offsets = [1, 0], sizes = [1, 128], strides = [1, 1]} : vector<8x128xf32> to vector<1x128xf32>
    %46 = vector.extract_strided_slice %19 {offsets = [8, 0], sizes = [8, 128], strides = [1, 1]} : vector<48x128xf32> to vector<8x128xf32>
    %47 = vector.broadcast %45 : vector<1x128xf32> to vector<8x128xf32>
    %48 = arith.mulf %47, %46 : vector<8x128xf32>
    %49 = arith.addf %44, %48 : vector<8x128xf32>
    %50 = vector.extract_strided_slice %40 {offsets = [2, 0], sizes = [1, 128], strides = [1, 1]} : vector<8x128xf32> to vector<1x128xf32>
    %51 = vector.extract_strided_slice %19 {offsets = [16, 0], sizes = [8, 128], strides = [1, 1]} : vector<48x128xf32> to vector<8x128xf32>
    %52 = vector.broadcast %50 : vector<1x128xf32> to vector<8x128xf32>
    %53 = arith.mulf %52, %51 : vector<8x128xf32>
    %54 = arith.addf %49, %53 : vector<8x128xf32>
    %55 = vector.extract_strided_slice %40 {offsets = [3, 0], sizes = [1, 128], strides = [1, 1]} : vector<8x128xf32> to vector<1x128xf32>
    %56 = vector.extract_strided_slice %19 {offsets = [24, 0], sizes = [8, 128], strides = [1, 1]} : vector<48x128xf32> to vector<8x128xf32>
    %57 = vector.broadcast %55 : vector<1x128xf32> to vector<8x128xf32>
    %58 = arith.mulf %57, %56 : vector<8x128xf32>
    %59 = arith.addf %54, %58 : vector<8x128xf32>
    %60 = vector.extract_strided_slice %40 {offsets = [4, 0], sizes = [1, 128], strides = [1, 1]} : vector<8x128xf32> to vector<1x128xf32>
    %61 = vector.extract_strided_slice %19 {offsets = [32, 0], sizes = [8, 128], strides = [1, 1]} : vector<48x128xf32> to vector<8x128xf32>
    %62 = vector.broadcast %60 : vector<1x128xf32> to vector<8x128xf32>
    %63 = arith.mulf %62, %61 : vector<8x128xf32>
    %64 = arith.addf %59, %63 : vector<8x128xf32>
    %65 = vector.extract_strided_slice %40 {offsets = [5, 0], sizes = [1, 128], strides = [1, 1]} : vector<8x128xf32> to vector<1x128xf32>
    %66 = vector.extract_strided_slice %19 {offsets = [40, 0], sizes = [8, 128], strides = [1, 1]} : vector<48x128xf32> to vector<8x128xf32>
    %67 = vector.broadcast %65 : vector<1x128xf32> to vector<8x128xf32>
    %68 = arith.mulf %67, %66 : vector<8x128xf32>
    %69 = arith.addf %64, %68 : vector<8x128xf32>
    %c0_13 = arith.constant 0 : index
    %c0_14 = arith.constant 0 : index
    %70 = vector.load %arg6[%c0_13, %c0_14] : memref<8x1xf32, #tpu.memory_space<vmem>>, vector<8x1xf32>
    %71 = vector.broadcast %70 : vector<8x1xf32> to vector<8x128xf32>
    %72 = arith.mulf %69, %71 : vector<8x128xf32>
    %cst_15 = arith.constant dense<0.000000e+00> : vector<128xf32>
    %73 = vector.multi_reduction <add>, %72, %cst_15 [0] : vector<8x128xf32> to vector<128xf32>
    %74 = vector.shape_cast %73 : vector<128xf32> to vector<1x128xf32>
    %c0_16 = arith.constant 0 : index
    %75 = memref.load %arg7[%c0_16] : memref<1xf32, #tpu.memory_space<smem>>
    %76 = vector.broadcast %75 : f32 to vector<1x128xf32>
    %77 = arith.addf %74, %76 : vector<1x128xf32>
    %c0_17 = arith.constant 0 : index
    %c0_18 = arith.constant 0 : index
    %78 = vector.load %arg8[%c0_17, %c0_18] : memref<1x128xf32, #tpu.memory_space<vmem>>, vector<1x128xf32>
    tpu.vector_store %arg8[%c0_17, %c0_18], %77 {strides = array<i32>} : memref<1x128xf32, #tpu.memory_space<vmem>>, vector<1x128xf32>,
    return
  }
  func.func @transform_0(%arg0: i32) -> (i32, i32) {
    %c0_i32 = arith.constant 0 : i32
    %c0_i32_0 = arith.constant 0 : i32
    return %c0_i32, %arg0 : i32, i32
  }
  func.func @transform_1(%arg0: i32) -> (i32, i32) {
    %c0_i32 = arith.constant 0 : i32
    %c0_i32_0 = arith.constant 0 : i32
    %c0_i32_1 = arith.constant 0 : i32
    return %c0_i32, %c0_i32_0 : i32, i32
  }
  func.func @transform_2(%arg0: i32) -> (i32, i32) {
    %c0_i32 = arith.constant 0 : i32
    %c0_i32_0 = arith.constant 0 : i32
    %c0_i32_1 = arith.constant 0 : i32
    return %c0_i32, %c0_i32_0 : i32, i32
  }
  func.func @transform_3(%arg0: i32) -> (i32, i32) {
    %c0_i32 = arith.constant 0 : i32
    %c0_i32_0 = arith.constant 0 : i32
    %c0_i32_1 = arith.constant 0 : i32
    return %c0_i32, %c0_i32_0 : i32, i32
  }
  func.func @transform_4(%arg0: i32) -> (i32, i32) {
    %c0_i32 = arith.constant 0 : i32
    %c0_i32_0 = arith.constant 0 : i32
    %c0_i32_1 = arith.constant 0 : i32
    return %c0_i32, %c0_i32_0 : i32, i32
  }
  func.func @transform_5(%arg0: i32) -> (i32, i32) {
    %c0_i32 = arith.constant 0 : i32
    %c0_i32_0 = arith.constant 0 : i32
    %c0_i32_1 = arith.constant 0 : i32
    return %c0_i32, %c0_i32_0 : i32, i32
  }
  func.func @transform_6(%arg0: i32) -> i32 {
    %c0_i32 = arith.constant 0 : i32
    %c0_i32_0 = arith.constant 0 : i32
    return %c0_i32 : i32
  }
  func.func @transform_7(%arg0: i32) -> (i32, i32) {
    %c0_i32 = arith.constant 0 : i32
    %c0_i32_0 = arith.constant 0 : i32
    return %c0_i32, %arg0 : i32, i32
  }
}

</mosaic_0001>

<llo_original>
// kernel: tpu_custom_call.1
$region0: #{tpu_custom_call.1}
  #allocation0 [shape = 'u32[]', space=smem, size = 0x4, offset = 0x4, fixed_abs, tag = 'smem constant byte address 0x4 - core index']
  #allocation1 [shape = 'u32[144,128]{1,0:T(1,128)}', space=vmem, size = 0x12000, scoped, tag = 'internal scratch']
  #allocation2 [shape = 'f32[1]{0:T(128)S(6)}', space=smem, size = 0x200, scoped, tag = 'scoped memory for tpu_custom_call.1']
  %s0 = inlined_call_operand.hbm [shape: f32[32,300], index: 0, kind: input, shape index: {}]
  %s1 = inlined_call_operand.vmem [shape: f32[48,48], index: 1, kind: input, shape index: {}]
  %s2 = inlined_call_operand.vmem [shape: f32[48,1], index: 2, kind: input, shape index: {}]
  %s3 = inlined_call_operand.vmem [shape: f32[8,48], index: 3, kind: input, shape index: {}]
  %s4 = inlined_call_operand.vmem [shape: f32[8,1], index: 4, kind: input, shape index: {}]
  %s5 = inlined_call_operand.vmem [shape: f32[8,1], index: 5, kind: input, shape index: {}]
  %s6 = inlined_call_operand.<no memory space> [shape: f32[1], index: 6, kind: input, shape index: {}]
  %s7 = inlined_call_operand.hbm [shape: f32[1,300], index: 7, kind: output, shape index: {}]
  %s8 = sld [smem:[#allocation0]]
  $region65: #{tpu_custom_call.1} parent=0
    _
  %s10 = ssub.s32 1, %s8
  %s11 = scalar_select 0, %s10, %s8
  %12 = sst [smem:[#allocation2]] %s6
  $region1: #{tpu_custom_call.1} parent=0
    #allocation3 [shape = 'u8[32768]{0}', space=vmem, size = 0x8000, scoped, tag = 'input window, operand 0']
    #allocation4 [shape = 's32[2]{0}', space=sflag, size = 0x8, scoped, tag = 'scoped memory for tpu_custom_call.1']
    #allocation5 [shape = 's32[2]{0}', space=sflag, size = 0x8, scoped, tag = 'scoped memory for tpu_custom_call.1']
    #allocation6 [shape = 'u8[1024]{0}', space=vmem, size = 0x400, scoped, tag = 'output window, operand 0']
    %13 = vsyncpa [#allocation4], 0
    %s14 = scalar_lea.sflag [#allocation4], 1
    %15 = vsyncpa %s14, 0
    %16 = vsyncpa [#allocation5], 0
    %s17 = scalar_lea.sflag [#allocation5], 1
    %18 = vsyncpa %s17, 0
    loop: start=0, step=1, limit=5
    $region2: #{tpu_custom_call.1} parent=1 // loop_pre_header
      _
    $region3: #{tpu_custom_call.1} parent=1 // loop_header
      %s20 = sphi 0, %s24
      %p21 = scmp.ge.s32.totalorder %s20, 5
      %s30 = sphi 0, %s32
      %s33 = sphi 0, %s30
      %s34 = sphi 0, %s33
      %s50 = sphi 0, %s34
      %s54 = sphi 0, %s54
      %s56 = sphi 0, %s54
      %s57 = sphi 0, %s56
      %s71 = sphi 0, %s57
      %s75 = sphi 0, %s75
      %s77 = sphi 0, %s75
      %s78 = sphi 0, %s77
      %s92 = sphi 0, %s78
      %s96 = sphi 0, %s96
      %s98 = sphi 0, %s96
      %s99 = sphi 0, %s98
      %s113 = sphi 0, %s99
      %s117 = sphi 0, %s117
      %s119 = sphi 0, %s117
      %s120 = sphi 0, %s119
      %s134 = sphi 0, %s120
      %s138 = sphi 0, %s138
      %s140 = sphi 0, %s138
      %s141 = sphi 0, %s140
      %s155 = sphi 0, %s141
      %s159 = sphi 0, %s159
      %s161 = sphi 0, %s159
      %s162 = sphi 0, %s161
      %s176 = sphi 0, %s162
      %s182 = sphi 0, %s184
      %s185 = sphi 0, %s182
      %s186 = sphi 0, %s185
      %s202 = sphi 0, %s186
    $region4: #{tpu_custom_call.1} parent=1 // loop_header_branch
      %23 = sbr.rel (%p21) target = $region8
    $region5: #{tpu_custom_call.1} parent=1 // loop_body
      %s25 = ssub.s32 %s20, 1
      %s26 = ssub.s32 %s20, 2
      %s27 = sadd.s32 %s20, 1
      %s28 = ssub.s32 %s20, %s27
      %p29 = scmp.eq.s32.totalorder %s28, 0
      %s31 = sadd.s32 %s30, 1
      %s32 = scalar_select %p29, %s30, %s31
      %p35 = pneg %p29
      %p36 = scmp.eq.s32.totalorder %s20, 2
      %p37 = por %p35, %p36
      %p38 = scmp.ne.s32.totalorder %s30, %s33
      %p39 = scmp.eq.s32.totalorder %s20, 0
      %p40 = por %p38, %p39
      %p41 = scmp.ne.s32.totalorder %s30, %s33
      %p42 = scmp.eq.s32.totalorder %s25, 2
      %p43 = por %p41, %p42
      %p44 = scmp.ne.s32.totalorder %s33, %s34
      %p45 = scmp.eq.s32.totalorder %s25, 0
      %p46 = por %p44, %p45
      %p47 = scmp.ne.s32.totalorder %s33, %s34
      %p48 = scmp.eq.s32.totalorder %s26, 2
      %p49 = por %p47, %p48
      %p51 = scmp.ne.s32.totalorder %s34, %s50
      %p52 = scmp.eq.s32.totalorder %s26, 0
      %p53 = por %p51, %p52
      %s55 = sadd.s32 %s54, 1
      %p58 = scmp.eq.s32.totalorder %s20, 2
      %p59 = scmp.ne.s32.totalorder %s54, %s56
      %p60 = scmp.eq.s32.totalorder %s20, 0
      %p61 = por %p59, %p60
      %p62 = scmp.ne.s32.totalorder %s54, %s56
      %p63 = scmp.eq.s32.totalorder %s25, 2
      %p64 = por %p62, %p63
      %p65 = scmp.ne.s32.totalorder %s56, %s57
      %p66 = scmp.eq.s32.totalorder %s25, 0
      %p67 = por %p65, %p66
      %p68 = scmp.ne.s32.totalorder %s56, %s57
      %p69 = scmp.eq.s32.totalorder %s26, 2
      %p70 = por %p68, %p69
      %p72 = scmp.ne.s32.totalorder %s57, %s71
      %p73 = scmp.eq.s32.totalorder %s26, 0
      %p74 = por %p72, %p73
      %s76 = sadd.s32 %s75, 1
      %p79 = scmp.eq.s32.totalorder %s20, 2
      %p80 = scmp.ne.s32.totalorder %s75, %s77
      %p81 = scmp.eq.s32.totalorder %s20, 0
      %p82 = por %p80, %p81
      %p83 = scmp.ne.s32.totalorder %s75, %s77
      %p84 = scmp.eq.s32.totalorder %s25, 2
      %p85 = por %p83, %p84
      %p86 = scmp.ne.s32.totalorder %s77, %s78
      %p87 = scmp.eq.s32.totalorder %s25, 0
      %p88 = por %p86, %p87
      %p89 = scmp.ne.s32.totalorder %s77, %s78
      %p90 = scmp.eq.s32.totalorder %s26, 2
      %p91 = por %p89, %p90
      %p93 = scmp.ne.s32.totalorder %s78, %s92
      %p94 = scmp.eq.s32.totalorder %s26, 0
      %p95 = por %p93, %p94
      %s97 = sadd.s32 %s96, 1
      %p100 = scmp.eq.s32.totalorder %s20, 2
      %p101 = scmp.ne.s32.totalorder %s96, %s98
      %p102 = scmp.eq.s32.totalorder %s20, 0
      %p103 = por %p101, %p102
      %p104 = scmp.ne.s32.totalorder %s96, %s98
      %p105 = scmp.eq.s32.totalorder %s25, 2
      %p106 = por %p104, %p105
      %p107 = scmp.ne.s32.totalorder %s98, %s99
      %p108 = scmp.eq.s32.totalorder %s25, 0
      %p109 = por %p107, %p108
      %p110 = scmp.ne.s32.totalorder %s98, %s99
      %p111 = scmp.eq.s32.totalorder %s26, 2
      %p112 = por %p110, %p111
      %p114 = scmp.ne.s32.totalorder %s99, %s113
      %p115 = scmp.eq.s32.totalorder %s26, 0
      %p116 = por %p114, %p115
      %s118 = sadd.s32 %s117, 1
      %p121 = scmp.eq.s32.totalorder %s20, 2
      %p122 = scmp.ne.s32.totalorder %s117, %s119
      %p123 = scmp.eq.s32.totalorder %s20, 0
      %p124 = por %p122, %p123
      %p125 = scmp.ne.s32.totalorder %s117, %s119
      %p126 = scmp.eq.s32.totalorder %s25, 2
      %p127 = por %p125, %p126
      %p128 = scmp.ne.s32.totalorder %s119, %s120
      %p129 = scmp.eq.s32.totalorder %s25, 0
      %p130 = por %p128, %p129
      %p131 = scmp.ne.s32.totalorder %s119, %s120
      %p132 = scmp.eq.s32.totalorder %s26, 2
      %p133 = por %p131, %p132
      %p135 = scmp.ne.s32.totalorder %s120, %s134
      %p136 = scmp.eq.s32.totalorder %s26, 0
      %p137 = por %p135, %p136
      %s139 = sadd.s32 %s138, 1
      %p142 = scmp.eq.s32.totalorder %s20, 2
      %p143 = scmp.ne.s32.totalorder %s138, %s140
      %p144 = scmp.eq.s32.totalorder %s20, 0
      %p145 = por %p143, %p144
      %p146 = scmp.ne.s32.totalorder %s138, %s140
      %p147 = scmp.eq.s32.totalorder %s25, 2
      %p148 = por %p146, %p147
      %p149 = scmp.ne.s32.totalorder %s140, %s141
      %p150 = scmp.eq.s32.totalorder %s25, 0
      %p151 = por %p149, %p150
      %p152 = scmp.ne.s32.totalorder %s140, %s141
      %p153 = scmp.eq.s32.totalorder %s26, 2
      %p154 = por %p152, %p153
      %p156 = scmp.ne.s32.totalorder %s141, %s155
      %p157 = scmp.eq.s32.totalorder %s26, 0
      %p158 = por %p156, %p157
      %s160 = sadd.s32 %s159, 1
      %p163 = scmp.eq.s32.totalorder %s20, 2
      %p164 = scmp.ne.s32.totalorder %s159, %s161
      %p165 = scmp.eq.s32.totalorder %s20, 0
      %p166 = por %p164, %p165
      %p167 = scmp.ne.s32.totalorder %s159, %s161
      %p168 = scmp.eq.s32.totalorder %s25, 2
      %p169 = por %p167, %p168
      %p170 = scmp.ne.s32.totalorder %s161, %s162
      %p171 = scmp.eq.s32.totalorder %s25, 0
      %p172 = por %p170, %p171
      %p173 = scmp.ne.s32.totalorder %s161, %s162
      %p174 = scmp.eq.s32.totalorder %s26, 2
      %p175 = por %p173, %p174
      %p177 = scmp.ne.s32.totalorder %s162, %s176
      %p178 = scmp.eq.s32.totalorder %s26, 0
      %p179 = por %p177, %p178
      %s180 = ssub.s32 %s20, %s27
      %p181 = scmp.eq.s32.totalorder %s180, 0
      %s183 = sadd.s32 %s182, 1
      %s184 = scalar_select %p181, %s182, %s183
      %p187 = pneg %p181
      %p188 = scmp.eq.s32.totalorder %s20, 2
      %p189 = por %p187, %p188
      %p190 = scmp.ne.s32.totalorder %s182, %s185
      %p191 = scmp.eq.s32.totalorder %s20, 0
      %p192 = por %p190, %p191
      %p193 = scmp.ne.s32.totalorder %s182, %s185
      %p194 = scmp.eq.s32.totalorder %s25, 2
      %p195 = por %p193, %p194
      %p196 = scmp.ne.s32.totalorder %s185, %s186
      %p197 = scmp.eq.s32.totalorder %s25, 0
      %p198 = por %p196, %p197
      %p199 = scmp.ne.s32.totalorder %s185, %s186
      %p200 = scmp.eq.s32.totalorder %s26, 2
      %p201 = por %p199, %p200
      %p203 = scmp.ne.s32.totalorder %s186, %s202
      %p204 = scmp.eq.s32.totalorder %s26, 0
      %p205 = por %p203, %p204
      %p206 = scmp.le.s32.totalorder 1, %s20
      %p207 = scmp.lt.s32.totalorder %s20, 4
      %p208 = pnand %p206, %p207
      %p209 = pneg %p208
      // Predicated region
      $region9: #{tpu_custom_call.1} parent=5 // pred_check
        _
      $region10: #{tpu_custom_call.1} parent=5 // pred_check_branch
        %211 = sbr.rel (%p208) target = $region12
      $region11: #{tpu_custom_call.1} parent=5 // pred_region
        %s212 = ssub.s32 %s20, 1
        // Predicated region
        $region13: #{tpu_custom_call.1} parent=11 // pred_check
          %p213 = pneg %p67
        $region14: #{tpu_custom_call.1} parent=11 // pred_check_branch
          %215 = sbr.rel (%p213) target = $region16
        $region15: #{tpu_custom_call.1} parent=11 // pred_region
          _
        $region16: #{tpu_custom_call.1} parent=11 // pred_fallthru
          _
        // Predicated region
        $region17: #{tpu_custom_call.1} parent=11 // pred_check
          %p216 = pneg %p88
        $region18: #{tpu_custom_call.1} parent=11 // pred_check_branch
          %218 = sbr.rel (%p216) target = $region20
        $region19: #{tpu_custom_call.1} parent=11 // pred_region
          _
        $region20: #{tpu_custom_call.1} parent=11 // pred_fallthru
          _
        // Predicated region
        $region21: #{tpu_custom_call.1} parent=11 // pred_check
          %p219 = pneg %p109
        $region22: #{tpu_custom_call.1} parent=11 // pred_check_branch
          %221 = sbr.rel (%p219) target = $region24
        $region23: #{tpu_custom_call.1} parent=11 // pred_region
          _
        $region24: #{tpu_custom_call.1} parent=11 // pred_fallthru
          _
        // Predicated region
        $region25: #{tpu_custom_call.1} parent=11 // pred_check
          %p222 = pneg %p130
        $region26: #{tpu_custom_call.1} parent=11 // pred_check_branch
          %224 = sbr.rel (%p222) target = $region28
        $region27: #{tpu_custom_call.1} parent=11 // pred_region
          _
        $region28: #{tpu_custom_call.1} parent=11 // pred_fallthru
          _
        // Predicated region
        $region29: #{tpu_custom_call.1} parent=11 // pred_check
          %p225 = pneg %p151
        $region30: #{tpu_custom_call.1} parent=11 // pred_check_branch
          %227 = sbr.rel (%p225) target = $region32
        $region31: #{tpu_custom_call.1} parent=11 // pred_region
          _
        $region32: #{tpu_custom_call.1} parent=11 // pred_fallthru
          _
        // Predicated region
        $region33: #{tpu_custom_call.1} parent=11 // pred_check
          %p228 = pneg %p172
        $region34: #{tpu_custom_call.1} parent=11 // pred_check_branch
          %230 = sbr.rel (%p228) target = $region36
        $region35: #{tpu_custom_call.1} parent=11 // pred_region
          _
        $region36: #{tpu_custom_call.1} parent=11 // pred_fallthru
          _
      $region12: #{tpu_custom_call.1} parent=5 // pred_fallthru
        _
      %p231 = scmp.lt.s32.totalorder %s20, 3
      // Predicated region
      $region37: #{tpu_custom_call.1} parent=5 // pred_check
        %p232 = pneg %p231
      $region38: #{tpu_custom_call.1} parent=5 // pred_check_branch
        %234 = sbr.rel (%p232) target = $region40
      $region39: #{tpu_custom_call.1} parent=5 // pred_region
        // Predicated region
        $region41: #{tpu_custom_call.1} parent=39 // pred_check
          %p235 = pneg %p40
        $region42: #{tpu_custom_call.1} parent=39 // pred_check_branch
          %237 = sbr.rel (%p235) target = $region44
        $region43: #{tpu_custom_call.1} parent=39 // pred_region
          %s238 = sand.u32 %s30, 1
          %s239 = scalar_lea.sflag [#allocation4], %s238
          %s240 = sand.u32 %s30, 1
          %s241 = smul.addr %s240, 32
          %s242 = scalar_lea.vmem [#allocation3], %s241
          %s244 = ssub.s32 512, 512
          %245 = vsyncadd %s239, %s244
          %s246 = smul.addr %s20, 128
          %s247 = scalar_lea.hbm %s0, %s246
          %s248 = sshll.u32 %s242, 4
          %s249 = int_to_ptr.vmem [resolvable:$true] %s248
          %254 = dma.hbm_to_vmem [thread:$0]  %s247, 512, %s249, %s239, 384, 128, 8
        $region44: #{tpu_custom_call.1} parent=39 // pred_fallthru
          _
      $region40: #{tpu_custom_call.1} parent=5 // pred_fallthru
        _
      %p255 = scmp.le.s32.totalorder 1, %s20
      %p256 = scmp.lt.s32.totalorder %s20, 4
      %p257 = pnand %p255, %p256
      %p258 = pneg %p257
      // Predicated region
      $region45: #{tpu_custom_call.1} parent=5 // pred_check
        _
      $region46: #{tpu_custom_call.1} parent=5 // pred_check_branch
        %260 = sbr.rel (%p257) target = $region48
      $region47: #{tpu_custom_call.1} parent=5 // pred_region
        %s261 = ssub.s32 %s20, 1
        %s262 = sand.u32 %s33, 1
        %s263 = scalar_lea.sflag [#allocation4], %s262
        %s264 = sand.u32 %s33, 1
        %s265 = smul.addr %s264, 32
        %s266 = scalar_lea.vmem [#allocation3], %s265
        // Predicated region
        $region49: #{tpu_custom_call.1} parent=47 // pred_check
          %p267 = pneg %p46
        $region50: #{tpu_custom_call.1} parent=47 // pred_check_branch
          %269 = sbr.rel (%p267) target = $region52
        $region51: #{tpu_custom_call.1} parent=47 // pred_region
          %270 = dma.done %s263, 512
        $region52: #{tpu_custom_call.1} parent=47 // pred_fallthru
          _
        %s271 = sand.u32 %s33, 1
        %s272 = scalar_lea.sflag [#allocation4], %s271
        %s273 = sand.u32 %s33, 1
        %s274 = smul.addr %s273, 32
        %s275 = scalar_lea.vmem [#allocation3], %s274
        %p276 = pneg %p46
        %p277 = pneg %p43
        %p278 = pneg %p67
        %p279 = pneg %p64
        %p280 = pneg %p88
        %p281 = pneg %p85
        %p282 = pneg %p109
        %p283 = pneg %p106
        %p284 = pneg %p130
        %p285 = pneg %p127
        %p286 = pneg %p151
        %p287 = pneg %p148
        %p288 = pneg %p172
        %p289 = pneg %p169
        %p290 = pneg %p198
        %p291 = pneg %p195
        %s292 = sand.u32 %s185, 1
        %s293 = scalar_lea.sflag [#allocation5], %s292
        %s294 = sand.u32 %s185, 1
        %s295 = scalar_lea.vmem [#allocation6], %s294
        %v296 = vld [vmem:[%s266] sm:$0xff]
        %v297 = vld [vmem:[%s266 + $0x8] sm:$0xff]
        %v298 = vld [vmem:[%s266 + $0x10] sm:$0xff]
        %v299 = vld [vmem:[%s266 + $0x18] sm:$0xff]
        %v300 = vmul.f32 %v296, %v297
        %v301 = vmul.f32 %v296, %v298
        %v302 = vmul.f32 %v296, %v299
        %v303 = vmul.f32 %v297, %v298
        %v304 = vmul.f32 %v297, %v299
        %v305 = vmul.f32 %v298, %v299
        %v306 = vld [vmem:[%s1] sm:$0xff]
        %v307 = vld [vmem:[%s1 + $0x8] sm:$0xff]
        %v308 = vld [vmem:[%s1 + $0x10] sm:$0xff]
        %v309 = vld [vmem:[%s1 + $0x18] sm:$0xff]
        %v310 = vld [vmem:[%s1 + $0x20] sm:$0xff]
        %v311 = vld [vmem:[%s1 + $0x28] sm:$0xff]
        %v312 = vld [vmem:[%s2] sm:$0xff]
        %v313 = vld [vmem:[%s2 + $0x8] sm:$0xff]
        %v314 = vld [vmem:[%s2 + $0x10] sm:$0xff]
        %v315 = vld [vmem:[%s2 + $0x18] sm:$0xff]
        %v316 = vld [vmem:[%s2 + $0x20] sm:$0xff]
        %v317 = vld [vmem:[%s2 + $0x28] sm:$0xff]
        %319 = vset.pattern.permute.xlu0 0
        %320 = vperm.xlu0 %319, %v312
        %v321 = vpop.permute.xlu0 %320
        %324 = vset.pattern.permute.xlu0 0
        %325 = vperm.xlu0 %324, %v313
        %v326 = vpop.permute.xlu0 %325
        %329 = vset.pattern.permute.xlu0 0
        %330 = vperm.xlu0 %329, %v314
        %v331 = vpop.permute.xlu0 %330
        %334 = vset.pattern.permute.xlu0 0
        %335 = vperm.xlu0 %334, %v315
        %v336 = vpop.permute.xlu0 %335
        %339 = vset.pattern.permute.xlu0 0
        %340 = vperm.xlu0 %339, %v316
        %v341 = vpop.permute.xlu0 %340
        %344 = vset.pattern.permute.xlu0 0
        %345 = vperm.xlu0 %344, %v317
        %v346 = vpop.permute.xlu0 %345
        %vm348 = vcmask 392192
        %v350 = vsel %vm348, %v306, 0
        %v353 = vsel %vm348, %v307, 0
        %v356 = vsel %vm348, %v308, 0
        %v359 = vsel %vm348, %v309, 0
        %v362 = vsel %vm348, %v310, 0
        %v365 = vsel %vm348, %v311, 0
        %367 = vmatprep.subr.mxu0 0.0
        %368 = vmatpush1.msra.mxu0 %v300
        %369 = vmatprep.subr.mxu0 0.0
        %370 = vmatpush1.msra.mxu0 %v301
        %371 = vmatprep.subr.mxu0 0.0
        %372 = vmatpush1.msra.mxu0 %v302
        %373 = vmatprep.subr.mxu0 0.0
        %374 = vmatpush1.msra.mxu0 %v303
        %375 = vmatprep.subr.mxu0 0.0
        %376 = vmatpush1.msra.mxu0 %v304
        %377 = vmatprep.subr.mxu0 0.0
        %378 = vmatpush1.msra.mxu0 %v305
        %379 = vmatprep.subr.mxu0 0.0
        %380 = vmatpush1.msra.mxu0 0.0
        %381 = vmatprep.subr.mxu0 0.0
        %382 = vmatpush1.msra.mxu0 0.0
        %383 = vmatprep.subr.mxu0 0.0
        %384 = vmatpush1.msra.mxu0 0.0
        %385 = vmatprep.subr.mxu0 0.0
        %386 = vmatpush1.msra.mxu0 0.0
        %387 = vmatprep.subr.mxu0 0.0
        %388 = vmatpush1.msra.mxu0 0.0
        %389 = vmatprep.subr.mxu0 0.0
        %390 = vmatpush1.msra.mxu0 0.0
        %391 = vmatprep.subr.mxu0 0.0
        %392 = vmatpush1.msra.mxu0 0.0
        %393 = vmatprep.subr.mxu0 0.0
        %394 = vmatpush1.msra.mxu0 0.0
        %395 = vmatprep.subr.mxu0 0.0
        %396 = vmatpush1.msra.mxu0 0.0
        %397 = vmatprep.subr.mxu0 0.0
        %398 = vmatpush1.msra.mxu0 0.0
        %399 = vmatprep.subr.mxu0 0.0
        %400 = vmatpush1.msra.mxu0 0.0
        %401 = vmatprep.subr.mxu0 0.0
        %402 = vmatpush1.msra.mxu0 0.0
        %403 = vmatprep.subr.mxu0 0.0
        %404 = vmatpush1.msra.mxu0 0.0
        %405 = vmatprep.subr.mxu0 0.0
        %406 = vmatpush1.msra.mxu0 0.0
        %407 = vmatprep.subr.mxu0 0.0
        %408 = vmatpush1.msra.mxu0 0.0
        %409 = vmatprep.subr.mxu0 0.0
        %410 = vmatpush1.msra.mxu0 0.0
        %411 = vmatprep.subr.mxu0 0.0
        %412 = vmatpush1.msra.mxu0 0.0
        %413 = vmatprep.subr.mxu0 0.0
        %414 = vmatpush1.msra.mxu0 0.0
        %415 = vmatprep.subr.mxu0 0.0
        %416 = vmatpush1.msra.mxu0 0.0
        %417 = vmatprep.subr.mxu0 0.0
        %418 = vmatpush1.msra.mxu0 0.0
        %419 = vmatprep.subr.mxu0 0.0
        %420 = vmatpush1.msra.mxu0 0.0
        %421 = vmatprep.subr.mxu0 0.0
        %422 = vmatpush1.msra.mxu0 0.0
        %423 = vmatprep.subr.mxu0 0.0
        %424 = vmatpush1.msra.mxu0 0.0
        %425 = vmatprep.subr.mxu0 0.0
        %426 = vmatpush1.msra.mxu0 0.0
        %427 = vmatprep.subr.mxu0 0.0
        %428 = vmatpush1.msra.mxu0 0.0
        %429 = vmatprep.subr.mxu0 0.0
        %430 = vmatpush1.msra.mxu0 0.0
        %431 = vmatprep.mubr.f32.mxu0 0.0
        %432 = vmatmul.mubr.f32.gmra.mrb[0].mxu0 %v350
        %v433 = vpop.f32.mrb[0].mxu0
        %v434 = vadd.f32 %v321, %v433
        %v435 = vpop.f32.mrb[0].mxu0
        %436 = vmatprep.mubr.f32.mxu0 0.0
        %437 = vmatmul.mubr.f32.gmra.mrb[0].mxu0 %v353
        %v438 = vpop.f32.mrb[0].mxu0
        %v439 = vadd.f32 %v326, %v438
        %v440 = vpop.f32.mrb[0].mxu0
        %441 = vmatprep.mubr.f32.mxu0 0.0
        %442 = vmatmul.mubr.f32.gmra.mrb[0].mxu0 %v356
        %v443 = vpop.f32.mrb[0].mxu0
        %v444 = vadd.f32 %v331, %v443
        %v445 = vpop.f32.mrb[0].mxu0
        %446 = vmatprep.mubr.f32.mxu0 0.0
        %447 = vmatmul.mubr.f32.gmra.mrb[0].mxu0 %v359
        %v448 = vpop.f32.mrb[0].mxu0
        %v449 = vadd.f32 %v336, %v448
        %v450 = vpop.f32.mrb[0].mxu0
        %451 = vmatprep.mubr.f32.mxu0 0.0
        %452 = vmatmul.mubr.f32.gmra.mrb[0].mxu0 %v362
        %v453 = vpop.f32.mrb[0].mxu0
        %v454 = vadd.f32 %v341, %v453
        %v455 = vpop.f32.mrb[0].mxu0
        %456 = vmatprep.mubr.f32.mxu0 0.0
        %457 = vmatmul.mubr.f32.gmra.mrb[0].mxu0 %v365
        %v458 = vpop.f32.mrb[0].mxu0
        %v459 = vadd.f32 %v346, %v458
        %v460 = vpop.f32.mrb[0].mxu0
        %461 = vdwg.mxu0
        %v462 = vmax.f32 %v434, 0.0
        %v463 = vmax.f32 %v439, 0.0
        %v464 = vmax.f32 %v444, 0.0
        %v465 = vmax.f32 %v449, 0.0
        %v466 = vmax.f32 %v454, 0.0
        %v467 = vmax.f32 %v459, 0.0
        %v468 = vld [vmem:[%s3] sm:$0xff]
        %v469 = vld [vmem:[%s4] sm:$0xff]
        %471 = vset.pattern.permute.xlu0 0
        %472 = vperm.xlu0 %471, %v469
        %v473 = vpop.permute.xlu0 %472
        %v476 = vsel %vm348, %v468, 0
        %478 = vmatprep.subr.mxu0 0.0
        %479 = vmatpush1.msra.mxu0 %v462
        %480 = vmatprep.subr.mxu0 0.0
        %481 = vmatpush1.msra.mxu0 %v463
        %482 = vmatprep.subr.mxu0 0.0
        %483 = vmatpush1.msra.mxu0 %v464
        %484 = vmatprep.subr.mxu0 0.0
        %485 = vmatpush1.msra.mxu0 %v465
        %486 = vmatprep.subr.mxu0 0.0
        %487 = vmatpush1.msra.mxu0 %v466
        %488 = vmatprep.subr.mxu0 0.0
        %489 = vmatpush1.msra.mxu0 %v467
        %490 = vmatprep.subr.mxu0 0.0
        %491 = vmatpush1.msra.mxu0 0.0
        %492 = vmatprep.subr.mxu0 0.0
        %493 = vmatpush1.msra.mxu0 0.0
        %494 = vmatprep.subr.mxu0 0.0
        %495 = vmatpush1.msra.mxu0 0.0
        %496 = vmatprep.subr.mxu0 0.0
        %497 = vmatpush1.msra.mxu0 0.0
        %498 = vmatprep.subr.mxu0 0.0
        %499 = vmatpush1.msra.mxu0 0.0
        %500 = vmatprep.subr.mxu0 0.0
        %501 = vmatpush1.msra.mxu0 0.0
        %502 = vmatprep.subr.mxu0 0.0
        %503 = vmatpush1.msra.mxu0 0.0
        %504 = vmatprep.subr.mxu0 0.0
        %505 = vmatpush1.msra.mxu0 0.0
        %506 = vmatprep.subr.mxu0 0.0
        %507 = vmatpush1.msra.mxu0 0.0
        %508 = vmatprep.subr.mxu0 0.0
        %509 = vmatpush1.msra.mxu0 0.0
        %510 = vmatprep.subr.mxu0 0.0
        %511 = vmatpush1.msra.mxu0 0.0
        %512 = vmatprep.subr.mxu0 0.0
        %513 = vmatpush1.msra.mxu0 0.0
        %514 = vmatprep.subr.mxu0 0.0
        %515 = vmatpush1.msra.mxu0 0.0
        %516 = vmatprep.subr.mxu0 0.0
        %517 = vmatpush1.msra.mxu0 0.0
        %518 = vmatprep.subr.mxu0 0.0
        %519 = vmatpush1.msra.mxu0 0.0
        %520 = vmatprep.subr.mxu0 0.0
        %521 = vmatpush1.msra.mxu0 0.0
        %522 = vmatprep.subr.mxu0 0.0
        %523 = vmatpush1.msra.mxu0 0.0
        %524 = vmatprep.subr.mxu0 0.0
        %525 = vmatpush1.msra.mxu0 0.0
        %526 = vmatprep.subr.mxu0 0.0
        %527 = vmatpush1.msra.mxu0 0.0
        %528 = vmatprep.subr.mxu0 0.0
        %529 = vmatpush1.msra.mxu0 0.0
        %530 = vmatprep.subr.mxu0 0.0
        %531 = vmatpush1.msra.mxu0 0.0
        %532 = vmatprep.subr.mxu0 0.0
        %533 = vmatpush1.msra.mxu0 0.0
        %534 = vmatprep.subr.mxu0 0.0
        %535 = vmatpush1.msra.mxu0 0.0
        %536 = vmatprep.subr.mxu0 0.0
        %537 = vmatpush1.msra.mxu0 0.0
        %538 = vmatprep.subr.mxu0 0.0
        %539 = vmatpush1.msra.mxu0 0.0
        %540 = vmatprep.subr.mxu0 0.0
        %541 = vmatpush1.msra.mxu0 0.0
        %542 = vmatprep.mubr.f32.mxu0 0.0
        %543 = vmatmul.mubr.f32.gmra.mrb[0].mxu0 %v476
        %v544 = vpop.f32.mrb[0].mxu0
        %v545 = vadd.f32 %v473, %v544
        %v546 = vpop.f32.mrb[0].mxu0
        %547 = vdwg.mxu0
        %v548 = vrot.slane %v545, 4
        %v549 = vmax.f32 %v545, %v548
        %v550 = vrot.slane %v549, 2
        %v551 = vmax.f32 %v549, %v550
        %v552 = vrot.slane %v551, 1
        %v553 = vmax.f32 %v551, %v552
        %v554 = vsub.f32 %v545, %v553
        %v555 = vmul.f32 %v554, 1.442695
        %v556 = vpow.pop %v555
        %v557 = vrot.slane %v556, 4
        %v558 = vadd.f32 %v556, %v557
        %v559 = vrot.slane %v558, 2
        %v560 = vadd.f32 %v558, %v559
        %v561 = vrot.slane %v560, 1
        %v562 = vadd.f32 %v560, %v561
        %v563 = vrcp.pop %v562
        %v564 = vmul.f32 %v556, %v563
        %v565 = vlaneseq
        %v566 = vshrl.u32 %v565, 7
        %v567 = vsub.s32 0, %v566
        %v568 = vrot.slane %v564, %v567
        %v569 = vmul.f32 %v568, %v300
        %v570 = vlaneseq
        %v571 = vshrl.u32 %v570, 7
        %v572 = vsub.s32 1, %v571
        %v573 = vrot.slane %v564, %v572
        %v574 = vmul.f32 %v573, %v301
        %v575 = vadd.f32 %v569, %v574
        %v576 = vlaneseq
        %v577 = vshrl.u32 %v576, 7
        %v578 = vsub.s32 2, %v577
        %v579 = vrot.slane %v564, %v578
        %v580 = vmul.f32 %v579, %v302
        %v581 = vadd.f32 %v575, %v580
        %v582 = vlaneseq
        %v583 = vshrl.u32 %v582, 7
        %v584 = vsub.s32 3, %v583
        %v585 = vrot.slane %v564, %v584
        %v586 = vmul.f32 %v585, %v303
        %v587 = vadd.f32 %v581, %v586
        %v588 = vlaneseq
        %v589 = vshrl.u32 %v588, 7
        %v590 = vsub.s32 4, %v589
        %v591 = vrot.slane %v564, %v590
        %v592 = vmul.f32 %v591, %v304
        %v593 = vadd.f32 %v587, %v592
        %v594 = vlaneseq
        %v595 = vshrl.u32 %v594, 7
        %v596 = vsub.s32 5, %v595
        %v597 = vrot.slane %v564, %v596
        %v598 = vmul.f32 %v597, %v305
        %v599 = vadd.f32 %v593, %v598
        %v600 = vld [vmem:[%s5] sm:$0xff]
        %602 = vset.pattern.permute.xlu0 0
        %603 = vperm.xlu0 %602, %v600
        %v604 = vpop.permute.xlu0 %603
        %v606 = vmul.f32 %v599, %v604
        %v607 = vrot.slane %v606, 4
        %v608 = vadd.f32 %v606, %v607
        %v609 = vrot.slane %v608, 2
        %v610 = vadd.f32 %v608, %v609
        %v611 = vrot.slane %v610, 1
        %v612 = vadd.f32 %v610, %v611
        %s613 = sld [smem:[#allocation2]]
        %v614 = vstv %s613
        %v615 = vadd.f32 %v612, %v614
        %616 = vst [vmem:[%s295] sm:$0x1] %v615
        %s617 = sand.u32 %s185, 1
        %s618 = scalar_lea.sflag [#allocation5], %s617
        %s619 = sand.u32 %s185, 1
        %s620 = scalar_lea.vmem [#allocation6], %s619
        // Predicated region
        $region53: #{tpu_custom_call.1} parent=47 // pred_check
          %p621 = pneg %p195
        $region54: #{tpu_custom_call.1} parent=47 // pred_check_branch
          %623 = sbr.rel (%p621) target = $region56
        $region55: #{tpu_custom_call.1} parent=47 // pred_region
          %s625 = ssub.s32 16, 16
          %626 = vsyncadd %s618, %s625
          %s627 = smul.addr %s25, 16
          %s628 = scalar_lea.hbm %s7, %s627
          %s630 = sshll.u32 %s620, 4
          %s631 = int_to_ptr.vmem [resolvable:$true] %s630
          %633 = dma.vmem_to_hbm [thread:$0]  %s631, 16, %s628, %s618
        $region56: #{tpu_custom_call.1} parent=47 // pred_fallthru
          _
      $region48: #{tpu_custom_call.1} parent=5 // pred_fallthru
        _
      %p634 = scmp.le.s32.totalorder 2, %s20
      // Predicated region
      $region57: #{tpu_custom_call.1} parent=5 // pred_check
        %p635 = pneg %p634
      $region58: #{tpu_custom_call.1} parent=5 // pred_check_branch
        %637 = sbr.rel (%p635) target = $region60
      $region59: #{tpu_custom_call.1} parent=5 // pred_region
        %s638 = ssub.s32 %s20, 2
        // Predicated region
        $region61: #{tpu_custom_call.1} parent=59 // pred_check
          %p639 = pneg %p201
        $region62: #{tpu_custom_call.1} parent=59 // pred_check_branch
          %641 = sbr.rel (%p639) target = $region64
        $region63: #{tpu_custom_call.1} parent=59 // pred_region
          %s642 = sand.u32 %s186, 1
          %s643 = scalar_lea.sflag [#allocation5], %s642
          %s644 = sand.u32 %s186, 1
          %s645 = scalar_lea.vmem [#allocation6], %s644
          %646 = dma.done %s643, 16
        $region64: #{tpu_custom_call.1} parent=59 // pred_fallthru
          _
      $region60: #{tpu_custom_call.1} parent=5 // pred_fallthru
        _
    $region6: #{tpu_custom_call.1} parent=1 // loop_footer
      %s24 = sadd.s32 1, %s20
    $region7: #{tpu_custom_call.1} parent=1 // loop_footer_branch
      %19 = sbr.rel target = $region3
    $region8: #{tpu_custom_call.1} parent=1 // loop_exit
      _
    %647 = vsyncpa [#allocation4], 1
    %s648 = scalar_lea.sflag [#allocation4], 1
    %649 = vsyncpa %s648, 1
    %650 = vsyncpa [#allocation5], 1
    %s651 = scalar_lea.sflag [#allocation5], 1
    %652 = vsyncpa %s651, 1

</llo_original>
